<compile_context>
chip_gen: v7x
topology: tpu7x:2x2x1
jax: 0.10.0
libtpu: 0.0.40
codegen_flags: <defaults>
</compile_context>

<pallas_src>
import math

import jax
import jax.numpy as jnp
from jax.experimental import pallas as pl
from jax.experimental.pallas import tpu as pltpu


_TARGET_BLOCK_BYTES = 4 * 1024 * 1024        # ~4 MiB/block (review: raise from 2 MiB)
_VMEM_LIMIT_BYTES = 32 * 1024 * 1024
_LANE_CANDIDATES = (1024, 512, 256, 128)     # lane-dense widths (multiples of 128)


def _add_relu_kernel(a_ref, b_ref, o_ref):
    # Fused elementwise hot path on the VPU: add + relu vs a scalar zero.
    s = a_ref[...] + b_ref[...]
    o_ref[...] = jnp.maximum(s, jnp.array(0, s.dtype)).astype(o_ref.dtype)


def _sublane_multiple(itemsize: int) -> int:
    # Row-tile granularity: f32 -> 8, bf16 -> 16, int8/fp8 -> 32.
    return max(8, 32 // itemsize)


def _cdiv(a: int, b: int) -> int:
    return -(-a // b)


def _round_up(x: int, m: int) -> int:
    return _cdiv(x, m) * m


def _choose_layout(total: int, itemsize: int):
    """Return (rows, lane, block_rows, grid) for a flat array of `total` elems,
    or None if `total` is not a multiple of 128 (caller uses tiny-pad fallback).
    """
    sub = _sublane_multiple(itemsize)

    lane = 0
    for cand in _LANE_CANDIDATES:
        if total % cand == 0:
            lane = cand
            break
    if lane == 0:
        return None

    rows = total // lane
    total_bytes = total * itemsize
    row_bytes = lane * itemsize
    max_block_rows = max(sub, (_TARGET_BLOCK_BYTES // row_bytes) // sub * sub)

    # Small tensors: one full-extent block (no (8,128) issue, no step overhead).
    if rows <= sub or (rows <= max_block_rows and total_bytes <= (1 << 20)):
        return rows, lane, rows, 1

    # Multi-block path: even grid so v7x's two TensorCores split evenly; at
    # least 4 steps for multi-MiB tensors so each core keeps >= 2 pipelined
    # steps of DMA/compute overlap.
    grid = _cdiv(rows, max_block_rows)
    min_grid = 4 if total_bytes >= (4 << 20) else 2
    grid = max(grid, min_grid)
    if grid % 2:
        grid += 1
    block_rows = min(_round_up(_cdiv(rows, grid), sub), rows)
    grid = _cdiv(rows, block_rows)           # last block may be partial (masked)
    return rows, lane, block_rows, grid


def add_relu(x21: jax.Array, x35: jax.Array, *, donate_first_input: bool = False) -> jax.Array:
    assert x21.shape == x35.shape and x21.dtype == x35.dtype
    orig_shape = x21.shape
    dtype = x21.dtype
    itemsize = jnp.dtype(dtype).itemsize
    total = int(math.prod(orig_shape)) if orig_shape else 1

    layout = _choose_layout(total, itemsize)
    pad = 0
    if layout is None:
        # Rare fallback (flat length not a multiple of 128): pad to the next
        # lane multiple.  Never hit by this module's NCHW activations.
        pad = (-total) % 128
        layout = _choose_layout(total + pad, itemsize)
    rows, lane, block_rows, grid = layout

    a = x21.reshape(-1)
    b = x35.reshape(-1)
    if pad:
        a = jnp.pad(a, (0, pad))
        b = jnp.pad(b, (0, pad))
    a2 = a.reshape(rows, lane)
    b2 = b.reshape(rows, lane)

    extra_kwargs = {}
    if donate_first_input:
        # Reuse x21's buffer for the output when the caller donates it.
        extra_kwargs["input_output_aliases"] = {0: 0}

    out2 = pl.pallas_call(
        _add_relu_kernel,
        out_shape=jax.ShapeDtypeStruct((rows, lane), dtype),
        grid_spec=pltpu.PrefetchScalarGridSpec(
            num_scalar_prefetch=0,
            grid=(grid,),
            in_specs=[
                pl.BlockSpec((block_rows, lane), lambda i: (i, 0)),
                pl.BlockSpec((block_rows, lane), lambda i: (i, 0)),
            ],
            out_specs=pl.BlockSpec((block_rows, lane), lambda i: (i, 0)),
        ),
        compiler_params=pltpu.CompilerParams(
            dimension_semantics=("parallel",),
            vmem_limit_bytes=_VMEM_LIMIT_BYTES,
        ),
        cost_estimate=pl.CostEstimate(
            flops=2 * total,                       # add + max per element
            transcendentals=0,
            bytes_accessed=3 * total * itemsize,   # 2 reads + 1 write
        ),
        **extra_kwargs,
    )(a2, b2)

    out_flat = out2.reshape(-1)
    if pad:
        out_flat = out_flat[:total]
    return out_flat.reshape(orig_shape)


# TODO(synk): when this add+relu neighbors another Pallas kernel (conv/matmul),
# fuse it into that kernel's epilogue instead of a standalone pallas_call.


if __name__ == "__main__":
    key = jax.random.PRNGKey(0)
    k1, k2 = jax.random.split(key)

    # Small smoke-test shape (op is purely elementwise, any NCHW works).
    shape_small = (2, 4, 16, 16)
    a_s = jax.random.normal(k1, shape_small, dtype=jnp.float32)
    b_s = jax.random.normal(k2, shape_small, dtype=jnp.float32)
    out_s = add_relu(a_s, b_s)
    jax.block_until_ready(out_s)
    ref_s = jnp.maximum(a_s + b_s, 0.0)
    assert out_s.shape == shape_small
    assert jnp.allclose(out_s, ref_s, atol=1e-6), "small-shape mismatch vs reference"

    # Module's actual shape (1, 528, 56, 56): exercises the multi-block,
    # lane-dense tiling path (lane=1024, block_rows=408 ~1.6 MiB, grid=4,
    # partial last block).
    shape_full = (1, 528, 56, 56)
    k3, k4 = jax.random.split(k2)
    a_f = jax.random.normal(k3, shape_full, dtype=jnp.float32)
    b_f = jax.random.normal(k4, shape_full, dtype=jnp.float32)
    out_f = add_relu(a_f, b_f)
    jax.block_until_ready(out_f)
    ref_f = jnp.maximum(a_f + b_f, 0.0)
    assert out_f.shape == shape_full
    assert jnp.allclose(out_f, ref_f, atol=1e-6), "full-shape mismatch vs reference"

    print("KERNEL_OK")
</pallas_src>

<mosaic_0001>
module attributes {stable_mosaic.version = 11 : i64} {
  func.func @_add_relu_kernel(%arg0: i32, %arg1: memref<2x1024xf32, #tpu.memory_space<vmem>>, %arg2: memref<2x1024xf32, #tpu.memory_space<vmem>>, %arg3: memref<2x1024xf32, #tpu.memory_space<vmem>>) attributes {dimension_semantics = [#tpu.dimension_semantics<parallel>], iteration_bounds = array<i64: 1>, scalar_prefetch = 0 : i64, scratch_operands = 0 : i64, tpu.core_type = #tpu.core_type<tc>, window_params = [{transform_indices = @transform_0, window_bounds = array<i64: 2, 1024>}, {transform_indices = @transform_1, window_bounds = array<i64: 2, 1024>}, {transform_indices = @transform_2, window_bounds = array<i64: 2, 1024>}]} {
    %c0 = arith.constant 0 : index
    %c0_0 = arith.constant 0 : index
    %0 = vector.load %arg1[%c0, %c0_0] : memref<2x1024xf32, #tpu.memory_space<vmem>>, vector<2x1024xf32>
    %c0_1 = arith.constant 0 : index
    %c0_2 = arith.constant 0 : index
    %1 = vector.load %arg2[%c0_1, %c0_2] : memref<2x1024xf32, #tpu.memory_space<vmem>>, vector<2x1024xf32>
    %2 = arith.addf %0, %1 : vector<2x1024xf32>
    %cst = arith.constant 0.000000e+00 : f32
    %3 = vector.broadcast %cst : f32 to vector<2x1024xf32>
    %4 = arith.maximumf %2, %3 : vector<2x1024xf32>
    %c0_3 = arith.constant 0 : index
    %c0_4 = arith.constant 0 : index
    %5 = vector.load %arg3[%c0_3, %c0_4] : memref<2x1024xf32, #tpu.memory_space<vmem>>, vector<2x1024xf32>
    tpu.vector_store %arg3[%c0_3, %c0_4], %4 {strides = array<i32>} : memref<2x1024xf32, #tpu.memory_space<vmem>>, vector<2x1024xf32>,
    return
  }
  func.func @transform_0(%arg0: i32) -> (i32, i32) {
    %c0_i32 = arith.constant 0 : i32
    %c0_i32_0 = arith.constant 0 : i32
    return %arg0, %c0_i32 : i32, i32
  }
  func.func @transform_1(%arg0: i32) -> (i32, i32) {
    %c0_i32 = arith.constant 0 : i32
    %c0_i32_0 = arith.constant 0 : i32
    return %arg0, %c0_i32 : i32, i32
  }
  func.func @transform_2(%arg0: i32) -> (i32, i32) {
    %c0_i32 = arith.constant 0 : i32
    %c0_i32_0 = arith.constant 0 : i32
    return %arg0, %c0_i32 : i32, i32
  }
}

</mosaic_0001>

<llo_original>
// kernel: tpu_custom_call.1
$region0: #{tpu_custom_call.1}
  #allocation0 [shape = 'u32[]', space=smem, size = 0x4, offset = 0x4, fixed_abs, tag = 'smem constant byte address 0x4 - core index']
  #allocation1 [shape = 'u32[144,128]{1,0:T(1,128)}', space=vmem, size = 0x12000, scoped, tag = 'internal scratch']
  %s0 = inlined_call_operand.hbm [shape: f32[2,1024], index: 0, kind: input, shape index: {}]
  %s1 = inlined_call_operand.hbm [shape: f32[2,1024], index: 1, kind: input, shape index: {}]
  %s2 = inlined_call_operand.hbm [shape: f32[2,1024], index: 2, kind: output, shape index: {}]
  %s3 = sld [smem:[#allocation0]]
  $region26: #{tpu_custom_call.1} parent=0
    _
  %s5 = ssub.s32 1, %s3
  %s6 = scalar_select 0, %s5, %s3
  $region1: #{tpu_custom_call.1} parent=0
    #allocation2 [shape = 'u8[8192]{0}', space=vmem, size = 0x2000, scoped, tag = 'input window, operand 0, single buffered']
    #allocation3 [shape = 's32[1]{0}', space=sflag, size = 0x4, scoped, tag = 'scoped memory for tpu_custom_call.1']
    #allocation4 [shape = 's32[1]{0}', space=sflag, size = 0x4, scoped, tag = 'scoped memory for tpu_custom_call.1']
    #allocation5 [shape = 'u8[8192]{0}', space=vmem, size = 0x2000, scoped, tag = 'input window, operand 1, single buffered']
    #allocation6 [shape = 's32[1]{0}', space=sflag, size = 0x4, scoped, tag = 'scoped memory for tpu_custom_call.1']
    #allocation7 [shape = 'u8[8192]{0}', space=vmem, size = 0x2000, scoped, tag = 'output window, operand 0, single buffered']
    %7 = vsyncpa [#allocation3], 0
    %8 = vsyncpa [#allocation6], 0
    %9 = vsyncpa [#allocation4], 0
    // Predicated region
    $region2: #{tpu_custom_call.1} parent=1 // pred_check
      _
    $region3: #{tpu_custom_call.1} parent=1 // pred_check_branch
      %11 = sbr.rel (0) target = $region5
    $region4: #{tpu_custom_call.1} parent=1 // pred_region
      %s13 = ssub.s32 256, 256
      %14 = vsyncadd [#allocation3], %s13
      %s16 = sshll.u32 [#allocation2], 4
      %s17 = int_to_ptr.vmem [resolvable:$true] %s16
      %19 = dma.hbm_to_vmem [thread:$0]  %s0, 256, %s17, [#allocation3]
    $region5: #{tpu_custom_call.1} parent=1 // pred_fallthru
      _
    // Predicated region
    $region6: #{tpu_custom_call.1} parent=1 // pred_check
      _
    $region7: #{tpu_custom_call.1} parent=1 // pred_check_branch
      %21 = sbr.rel (0) target = $region9
    $region8: #{tpu_custom_call.1} parent=1 // pred_region
      %s23 = ssub.s32 256, 256
      %24 = vsyncadd [#allocation6], %s23
      %s26 = sshll.u32 [#allocation5], 4
      %s27 = int_to_ptr.vmem [resolvable:$true] %s26
      %29 = dma.hbm_to_vmem [thread:$0]  %s1, 256, %s27, [#allocation6]
    $region9: #{tpu_custom_call.1} parent=1 // pred_fallthru
      _
    // Predicated region
    $region10: #{tpu_custom_call.1} parent=1 // pred_check
      _
    $region11: #{tpu_custom_call.1} parent=1 // pred_check_branch
      %31 = sbr.rel (0) target = $region13
    $region12: #{tpu_custom_call.1} parent=1 // pred_region
      %32 = dma.done [#allocation3], 256
    $region13: #{tpu_custom_call.1} parent=1 // pred_fallthru
      _
    // Predicated region
    $region14: #{tpu_custom_call.1} parent=1 // pred_check
      _
    $region15: #{tpu_custom_call.1} parent=1 // pred_check_branch
      %34 = sbr.rel (0) target = $region17
    $region16: #{tpu_custom_call.1} parent=1 // pred_region
      %35 = dma.done [#allocation6], 256
    $region17: #{tpu_custom_call.1} parent=1 // pred_fallthru
      _
    %v36 = vld [vmem:[#allocation2] sm:$0xff]
    %v37 = vld [vmem:[#allocation2 + $0x8] sm:$0xff]
    %v38 = vld [vmem:[#allocation5] sm:$0xff]
    %v39 = vld [vmem:[#allocation5 + $0x8] sm:$0xff]
    %v40 = vadd.f32 %v36, %v38
    %v41 = vadd.f32 %v37, %v39
    %v42 = vmax.f32 %v40, 0.0
    %v43 = vmax.f32 %v41, 0.0
    %44 = vst [vmem:[#allocation7] sm:$0xff] %v42
    %45 = vst [vmem:[#allocation7 + $0x8] sm:$0xff] %v43
    // Predicated region
    $region18: #{tpu_custom_call.1} parent=1 // pred_check
      _
    $region19: #{tpu_custom_call.1} parent=1 // pred_check_branch
      %47 = sbr.rel (0) target = $region21
    $region20: #{tpu_custom_call.1} parent=1 // pred_region
      %s49 = ssub.s32 256, 256
      %50 = vsyncadd [#allocation4], %s49
      %s52 = sshll.u32 [#allocation7], 4
      %s53 = int_to_ptr.vmem [resolvable:$true] %s52
      %55 = dma.vmem_to_hbm [thread:$0]  %s53, 256, %s2, [#allocation4]
    $region21: #{tpu_custom_call.1} parent=1 // pred_fallthru
      _
    // Predicated region
    $region22: #{tpu_custom_call.1} parent=1 // pred_check
      _
    $region23: #{tpu_custom_call.1} parent=1 // pred_check_branch
      %57 = sbr.rel (0) target = $region25
    $region24: #{tpu_custom_call.1} parent=1 // pred_region
      %58 = dma.done [#allocation4], 256
    $region25: #{tpu_custom_call.1} parent=1 // pred_fallthru
      _
    %59 = vsyncpa [#allocation3], 1
    %60 = vsyncpa [#allocation6], 1
    %61 = vsyncpa [#allocation4], 1

</llo_original>
